<compile_context>
chip_gen: v7x
topology: tpu7x:2x2x1
jax: 0.10.0
libtpu: 0.0.40
codegen_flags: <defaults>
</compile_context>

<pallas_src>
import functools
import math

import jax
import jax.numpy as jnp
from jax import lax
from jax.experimental import pallas as pl
from jax.experimental.pallas import tpu as pltpu


# LayerNormalization source is not included in the spec; assumed to be the common
# NeuralSRL/OpenNMT form: (x - mean) / (unbiased_std + eps) * gain + bias.
LN_EPS = 1e-3
_LOG2E = math.log2(math.e)


# --------------------------------------------------------------------------------------
# Hardware / feature helpers
# --------------------------------------------------------------------------------------
def _vmem_cap_bytes():
    # Narrow hardware query only; never masks kernel errors.
    try:
        cap = getattr(pltpu.get_tpu_info(), "vmem_capacity_bytes", None)
        if cap:
            return int(cap)
    except Exception:
        pass
    return 128 * 2 ** 20


def _vmem_limit(est_bytes):
    # Generation-aware: never request more than ~80% of physical VMEM (v7x: 64 MiB total).
    cap = int(0.8 * _vmem_cap_bytes())
    return int(min(cap, max(32 * 2 ** 20, 2 * int(est_bytes))))


def _default_compute_dtype():
    # On small-VMEM parts (v7x, 64 MiB/core) f32 resident weights + pipelined tiles do not
    # fit -> bf16 MXU operands (f32 accumulation) are mandatory there; f32 elsewhere.
    return jnp.bfloat16 if _vmem_cap_bytes() <= 64 * 2 ** 20 else jnp.float32


@functools.lru_cache(maxsize=None)
def _single_buffer_supported():
    """Feature-probe pl.Buffered(1) (single-buffered constant weights) with a tiny copy
    kernel — a targeted capability check instead of a blanket fallback around the real
    encoder-block kernels."""
    if not hasattr(pl, "Buffered"):
        return False

    def _probe(w_ref, o_ref):
        o_ref[...] = w_ref[...]

    try:
        out = pl.pallas_call(
            _probe,
            out_shape=jax.ShapeDtypeStruct((8, 128), jnp.float32),
            grid=(2,),
            in_specs=[pl.BlockSpec((8, 128), lambda i: (0, 0),
                                   pipeline_mode=pl.Buffered(1))],
            out_specs=pl.BlockSpec((8, 128), lambda i: (0, 0)),
        )(jnp.zeros((8, 128), jnp.float32))
        jax.block_until_ready(out)
        return True
    except Exception:
        return False


def _const_spec(shape, single_buffer):
    index_map = lambda *_: (0,) * len(shape)
    if single_buffer:
        # Constant index_map across the grid -> one VMEM copy is enough.
        return pl.BlockSpec(shape, index_map, pipeline_mode=pl.Buffered(1))
    return pl.BlockSpec(shape, index_map)


def _pick_tile(n, candidates):
    for c in candidates:
        if n % c == 0:
            return c
    # TODO(synk): non-divisible extents fall back to a single full-extent block; for very
    # large ragged inputs switch to a pl.cdiv grid with in-kernel masking instead.
    return n


# --------------------------------------------------------------------------------------
# In-kernel LayerNorm: one reciprocal per row, multiplies everywhere else.
# --------------------------------------------------------------------------------------
def _kernel_layer_norm(x, gain, bias, eps=LN_EPS):
    mu = jnp.mean(x, axis=-1, keepdims=True)
    d = x - mu
    var = jnp.sum(d * d, axis=-1, keepdims=True) * (1.0 / (x.shape[-1] - 1))  # unbiased std
    inv = 1.0 / (jnp.sqrt(var) + eps)                                          # [tm, 1]
    return (d * inv) * gain + bias


# --------------------------------------------------------------------------------------
# Kernel 1: row-wise FFN (+residual) -> LayerNorm -> fused Q|K|V projection over [B*L, D].
# --------------------------------------------------------------------------------------
def _row_kernel(x_ref,
                ln1g_ref, ln1b_ref, w1_ref, b1_ref, w2_ref, b2_ref,
                ln2g_ref, ln2b_ref, wqkv_ref, bqkv_ref,
                q_ref, k_ref, v_ref):
    x = x_ref[...].astype(jnp.float32)                                   # [tm, D]
    cdt = w1_ref.dtype                                                   # MXU operand dtype
    D = q_ref.shape[-1]

    # PositionwiseFeedForward.  TODO(synk): dropout (train mode) not implemented;
    # the forward is treated as eval/inference (dropout = identity).
    h = _kernel_layer_norm(x, ln1g_ref[...], ln1b_ref[...])
    inter = jnp.dot(h.astype(cdt), w1_ref[...],
                    preferred_element_type=jnp.float32) + b1_ref[...]
    inter = jnp.maximum(inter, 0.0)
    ffn = jnp.dot(inter.astype(cdt), w2_ref[...],
                  preferred_element_type=jnp.float32) + b2_ref[...] + x

    # EncoderBlock.layer_norm, then a single fused [tm, D] @ [D, 3D] Q|K|V projection.
    # The 1/sqrt(dim_per_head) query scale (and log2(e) for exp2 softmax) is folded into
    # Wq/bq in the wrapper.
    z = _kernel_layer_norm(ffn, ln2g_ref[...], ln2b_ref[...]).astype(cdt)
    qkv = jnp.dot(z, wqkv_ref[...], preferred_element_type=jnp.float32) + bqkv_ref[...]
    q_ref[...] = qkv[:, :D].astype(q_ref.dtype)
    k_ref[...] = qkv[:, D:2 * D].astype(k_ref.dtype)
    v_ref[...] = qkv[:, 2 * D:].astype(v_ref.dtype)


# --------------------------------------------------------------------------------------
# Kernel 2: flash-style attention (online softmax over the KV grid axis) + Wo + residual.
# --------------------------------------------------------------------------------------
def _attn_kernel(q_ref, k_ref, v_ref, res_ref, wo_ref, bo_ref,
                 out_ref,
                 m_ref, l_ref, acc_ref,
                 *, head_count, dim_per_head, tk, kv_resident, approx_recip):
    ki = pl.program_id(2)

    @pl.when(ki == 0)
    def _init():
        m_ref[...] = jnp.full(m_ref.shape, -jnp.inf, dtype=m_ref.dtype)
        l_ref[...] = jnp.zeros(l_ref.shape, dtype=l_ref.dtype)
        acc_ref[...] = jnp.zeros(acc_ref.shape, dtype=acc_ref.dtype)

    q = q_ref[0]                                                         # [tq, D]
    if kv_resident:
        # K/V for this batch are fully VMEM-resident; slice the current KV window.
        start = pl.multiple_of(ki * tk, tk)
        k_blk = k_ref[0, pl.ds(start, tk), :]                            # [tk, D]
        v_blk = v_ref[0, pl.ds(start, tk), :]                            # [tk, D]
    else:
        k_blk = k_ref[0]                                                 # [tk, D]
        v_blk = v_ref[0]                                                 # [tk, D]

    # Per-head 2-D dots on static lane slices (no head-split relayouts).  Scores already
    # carry the log2(e)/sqrt(dh) factor, so the softmax uses exp2 directly.
    # TODO(synk): optional slf_attn_mask path (masked_fill with -1e18) not implemented;
    # EncoderBlock's default (mask=None) is what this kernel computes.
    for h in range(head_count):
        sl = slice(h * dim_per_head, (h + 1) * dim_per_head)
        s = lax.dot_general(q[:, sl], k_blk[:, sl], (((1,), (1,)), ((), ())),
                            preferred_element_type=jnp.float32)          # [tq, tk]
        m_prev = m_ref[h]                                                # [tq, 1]
        m_new = jnp.maximum(m_prev, jnp.max(s, axis=-1, keepdims=True))
        alpha = jnp.exp2(m_prev - m_new)                                 # [tq, 1]
        p = jnp.exp2(s - m_new)                                          # [tq, tk]
        l_ref[h] = alpha * l_ref[h] + jnp.sum(p, axis=-1, keepdims=True)
        pv = jnp.dot(p.astype(v_blk.dtype), v_blk[:, sl],
                     preferred_element_type=jnp.float32)                 # [tq, dh]
        acc_ref[:, sl] = alpha * acc_ref[:, sl] + pv
        m_ref[h] = m_new

    @pl.when(ki == pl.num_programs(2) - 1)
    def _finalize():
        inv = pl.reciprocal(l_ref[...], approx=approx_recip)             # [H, tq, 1]
        # Per-head 1/l applied in place on the lane-dense accumulator (no concat).
        for h in range(head_count):
            sl = slice(h * dim_per_head, (h + 1) * dim_per_head)
            acc_ref[:, sl] = acc_ref[:, sl] * inv[h]
        ctx = acc_ref[...].astype(wo_ref.dtype)                          # [tq, D] lane-dense
        out = jnp.dot(ctx, wo_ref[...],
                      preferred_element_type=jnp.float32) + bo_ref[...]
        out_ref[0] = (out + res_ref[0].astype(jnp.float32)).astype(out_ref.dtype)


# --------------------------------------------------------------------------------------
# Wrapper
# --------------------------------------------------------------------------------------
def _encoder_block(enc_input, params, head_count, compute_dtype, approx_reciprocal):
    B, L, D = enc_input.shape
    assert D % head_count == 0
    dh = D // head_count
    Dff = params["w1"].shape[1]
    cdt = jnp.dtype(compute_dtype)
    csize = cdt.itemsize
    f32 = jnp.float32

    single_buf = _single_buffer_supported()
    wbuf = 1 if single_buf else 2
    w_spec = lambda s: _const_spec(s, single_buf)
    row2 = lambda a: jnp.asarray(a, f32).reshape(1, -1)   # 1-D params as lane-dense [1, N]

    # Fold the 1/sqrt(dim_per_head) query scale and log2(e) (exp2 softmax) into Wq/bq, and
    # fuse Wq|Wk|Wv into one [D, 3D] projection (single MXU call with N = 3D).
    scale = _LOG2E / math.sqrt(dh)
    wqkv = jnp.concatenate([params["wq"] * scale, params["wk"], params["wv"]],
                           axis=1).astype(cdt)
    bqkv = jnp.concatenate([params["bq"] * scale, params["bk"], params["bv"]],
                           axis=0).reshape(1, 3 * D).astype(f32)
    w1 = params["w1"].astype(cdt)
    w2 = params["w2"].astype(cdt)
    wo = params["wo"].astype(cdt)

    # ---------------- Kernel 1: flattened [B*L, D] rows ----------------
    BL = B * L
    x_flat = enc_input.reshape(BL, D)
    tm = _pick_tile(BL, (512, 256, 128))
    n_rows = BL // tm

    row_est = (tm * D * 4 * 2
               + (2 * D * Dff + 3 * D * D) * csize * wbuf
               + 3 * tm * D * csize * 2)
    row_cost = pl.CostEstimate(
        flops=int(BL * (4 * D * Dff + 6 * D * D + 24 * D)),
        transcendentals=int(2 * BL),
        bytes_accessed=int(BL * D * 4 + 3 * BL * D * csize
                           + (2 * D * Dff + 3 * D * D) * csize))
    row_out_spec = pl.BlockSpec((tm, D), lambda i: (i, 0))

    q_flat, k_flat, v_flat = pl.pallas_call(
        _row_kernel,
        out_shape=(jax.ShapeDtypeStruct((BL, D), cdt),) * 3,
        grid_spec=pltpu.PrefetchScalarGridSpec(
            num_scalar_prefetch=0,
            grid=(n_rows,),
            in_specs=[
                pl.BlockSpec((tm, D), lambda i: (i, 0)),       # x rows
                w_spec((1, D)), w_spec((1, D)),                # LN1 gain/bias
                w_spec((D, Dff)), w_spec((1, Dff)),            # W1, b1
                w_spec((Dff, D)), w_spec((1, D)),              # W2, b2
                w_spec((1, D)), w_spec((1, D)),                # LN2 gain/bias
                w_spec((D, 3 * D)), w_spec((1, 3 * D)),        # fused Wq|Wk|Wv, bq|bk|bv
            ],
            out_specs=(row_out_spec, row_out_spec, row_out_spec),
        ),
        compiler_params=pltpu.CompilerParams(
            dimension_semantics=("parallel",),
            vmem_limit_bytes=_vmem_limit(row_est)),
        cost_estimate=row_cost,
    )(x_flat,
      row2(params["ln1_g"]), row2(params["ln1_b"]),
      w1, row2(params["b1"]), w2, row2(params["b2"]),
      row2(params["ln2_g"]), row2(params["ln2_b"]),
      wqkv, bqkv)

    q = q_flat.reshape(B, L, D)
    k = k_flat.reshape(B, L, D)
    v = v_flat.reshape(B, L, D)

    # ---------------- Kernel 2: attention + output projection + residual ----------------
    tq = _pick_tile(L, (256, 128))
    tk = _pick_tile(L, (512, 256, 128))
    nq, nk = L // tq, L // tk

    # K/V residency: keep each batch's full K and V in VMEM (fetched once per batch element)
    # when they fit comfortably; otherwise stream [tk, D] tiles from HBM per KV step.
    kv_resident = (2 * 2 * L * D * csize) <= int(0.2 * _vmem_cap_bytes())
    if kv_resident:
        kv_rows = L
        k_spec = pl.BlockSpec((1, L, D), lambda b, qi, ki: (b, 0, 0))
        v_spec = pl.BlockSpec((1, L, D), lambda b, qi, ki: (b, 0, 0))
    else:
        kv_rows = tk
        k_spec = pl.BlockSpec((1, tk, D), lambda b, qi, ki: (b, ki, 0))
        v_spec = pl.BlockSpec((1, tk, D), lambda b, qi, ki: (b, ki, 0))

    attn_est = (tq * D * csize * 2                    # Q tile (double-buffered)
                + 2 * kv_rows * D * csize * 2         # K, V blocks
                + tq * D * 4 * 2                      # residual tile
                + (D * D * csize + D * 4) * wbuf      # Wo, bo
                + tq * D * 4 * 2                      # out tile
                + tq * D * 4                          # lane-dense acc scratch
                + 2 * head_count * tq * 128 * 4)      # m, l scratch (lane-padded)
    kv_read_mult = 1 if kv_resident else nq
    attn_cost = pl.CostEstimate(
        flops=int(4 * B * L * L * D + 2 * B * L * D * D),
        transcendentals=int(B * head_count * L * L),
        bytes_accessed=int(B * L * D * csize * (1 + 2 * kv_read_mult)
                           + 2 * B * L * D * 4 + D * D * csize))

    kernel = functools.partial(
        _attn_kernel, head_count=head_count, dim_per_head=dh, tk=tk,
        kv_resident=kv_resident, approx_recip=bool(approx_reciprocal))

    out = pl.pallas_call(
        kernel,
        out_shape=jax.ShapeDtypeStruct((B, L, D), jnp.float32),
        grid_spec=pltpu.PrefetchScalarGridSpec(
            num_scalar_prefetch=0,
            grid=(B, nq, nk),
            in_specs=[
                pl.BlockSpec((1, tq, D), lambda b, qi, ki: (b, qi, 0)),   # Q
                k_spec, v_spec,                                           # K, V
                pl.BlockSpec((1, tq, D), lambda b, qi, ki: (b, qi, 0)),   # enc_input residual
                w_spec((D, D)), w_spec((1, D)),                           # Wo, bo
            ],
            out_specs=pl.BlockSpec((1, tq, D), lambda b, qi, ki: (b, qi, 0)),
            scratch_shapes=[
                pltpu.VMEM((head_count, tq, 1), jnp.float32),   # running max (log2 domain)
                pltpu.VMEM((head_count, tq, 1), jnp.float32),   # running sum
                pltpu.VMEM((tq, D), jnp.float32),               # lane-dense output accumulator
            ],
        ),
        compiler_params=pltpu.CompilerParams(
            dimension_semantics=("parallel", "parallel", "arbitrary"),
            vmem_limit_bytes=_vmem_limit(attn_est)),
        cost_estimate=attn_cost,
    )(q, k, v, enc_input, wo, row2(params["bo"]))
    return out


def encoder_block(enc_input, params, head_count, compute_dtype=None,
                  approx_reciprocal=False):
    """EncoderBlock forward (dropout = identity, slf_attn_mask = None, top_attn dropped)."""
    if compute_dtype is None:
        compute_dtype = _default_compute_dtype()
    return _encoder_block(enc_input, params, head_count, compute_dtype, approx_reciprocal)


# --------------------------------------------------------------------------------------
# Parameters and pure-JAX reference
# --------------------------------------------------------------------------------------
def _ref_layer_norm(x, gain, bias, eps=LN_EPS):
    mu = jnp.mean(x, axis=-1, keepdims=True)
    d = x - mu
    var = jnp.sum(d * d, axis=-1, keepdims=True) / (x.shape[-1] - 1)  # unbiased (torch.std)
    return d / (jnp.sqrt(var) + eps) * gain + bias


def _orthogonal(key, shape):
    rows, cols = shape
    a = jax.random.normal(key, (max(rows, cols), min(rows, cols)), dtype=jnp.float32)
    q, r = jnp.linalg.qr(a)
    q = q * jnp.sign(jnp.diagonal(r))
    return q.T if rows < cols else q


def make_params(rng, model_dim, inner_dim):
    ks = jax.random.split(rng, 16)
    # PyTorch Linear weights are [out, in]; stored here pre-transposed to [in, out].
    return {
        "w1": _orthogonal(ks[0], (model_dim, inner_dim)),
        "b1": 0.01 * jax.random.normal(ks[1], (inner_dim,), dtype=jnp.float32),
        "w2": _orthogonal(ks[2], (inner_dim, model_dim)),
        "b2": 0.01 * jax.random.normal(ks[3], (model_dim,), dtype=jnp.float32),
        "wq": _orthogonal(ks[4], (model_dim, model_dim)),
        "bq": 0.01 * jax.random.normal(ks[5], (model_dim,), dtype=jnp.float32),
        "wk": _orthogonal(ks[6], (model_dim, model_dim)),
        "bk": 0.01 * jax.random.normal(ks[7], (model_dim,), dtype=jnp.float32),
        "wv": _orthogonal(ks[8], (model_dim, model_dim)),
        "bv": 0.01 * jax.random.normal(ks[9], (model_dim,), dtype=jnp.float32),
        "wo": _orthogonal(ks[10], (model_dim, model_dim)),
        "bo": 0.01 * jax.random.normal(ks[11], (model_dim,), dtype=jnp.float32),
        "ln1_g": 1.0 + 0.1 * jax.random.normal(ks[12], (model_dim,), dtype=jnp.float32),
        "ln1_b": 0.01 * jax.random.normal(ks[13], (model_dim,), dtype=jnp.float32),
        "ln2_g": 1.0 + 0.1 * jax.random.normal(ks[14], (model_dim,), dtype=jnp.float32),
        "ln2_b": 0.01 * jax.random.normal(ks[15], (model_dim,), dtype=jnp.float32),
    }


def reference_encoder_block(x, params, head_count):
    B, L, D = x.shape
    dh = D // head_count

    h = _ref_layer_norm(x, params["ln1_g"], params["ln1_b"])
    inter = jax.nn.relu(h @ params["w1"] + params["b1"])
    ffn = inter @ params["w2"] + params["b2"] + x
    z = _ref_layer_norm(ffn, params["ln2_g"], params["ln2_b"])

    def split(t):
        return t.reshape(B, L, head_count, dh).transpose(0, 2, 1, 3)

    K = split(z @ params["wk"] + params["bk"])
    V = split(z @ params["wv"] + params["bv"])
    Q = split(z @ params["wq"] + params["bq"]) / math.sqrt(dh)
    scores = jnp.einsum("bhqd,bhkd->bhqk", Q, K)
    attn = jax.nn.softmax(scores, axis=-1)
    ctx = jnp.einsum("bhqk,bhkd->bhqd", attn, V).transpose(0, 2, 1, 3).reshape(B, L, D)
    out = ctx @ params["wo"] + params["bo"]
    return out + x


if __name__ == "__main__":
    B, L, D, H, DFF = 2, 8, 32, 4, 64
    rng = jax.random.PRNGKey(0)
    r_x, r_p = jax.random.split(rng)

    x = jax.random.normal(r_x, (B, L, D), dtype=jnp.float32)
    params = make_params(r_p, D, DFF)

    ref = reference_encoder_block(x, params, H)

    # f32 path (tight tolerance).
    out_f32 = jax.block_until_ready(encoder_block(x, params, H, compute_dtype=jnp.float32))
    assert out_f32.shape == (B, L, D)
    assert jnp.allclose(out_f32, ref, atol=1e-3, rtol=1e-3), \
        float(jnp.max(jnp.abs(out_f32 - ref)))

    # bf16 MXU operands with f32 accumulation (looser tolerance).
    out_bf16 = jax.block_until_ready(encoder_block(x, params, H, compute_dtype=jnp.bfloat16))
    assert out_bf16.shape == (B, L, D)
    assert jnp.allclose(out_bf16, ref, atol=1e-1, rtol=1e-1), \
        float(jnp.max(jnp.abs(out_bf16 - ref)))

    print("KERNEL_OK")
</pallas_src>

<mosaic_0001>
module attributes {stable_mosaic.version = 11 : i64} {
  func.func @_probe(%arg0: i32, %arg1: memref<8x128xf32, #tpu.memory_space<vmem>>, %arg2: memref<8x128xf32, #tpu.memory_space<vmem>>) attributes {dimension_semantics = [#tpu.dimension_semantics<arbitrary>], iteration_bounds = array<i64: 2>, scalar_prefetch = 0 : i64, scratch_operands = 0 : i64, tpu.core_type = #tpu.core_type<tc>, window_params = [{pipeline_mode = #tpu.pipeline_mode<synchronous>, transform_indices = @transform_0, window_bounds = array<i64: 8, 128>}, {pipeline_mode = #tpu.pipeline_mode<synchronous>, transform_indices = @transform_1, window_bounds = array<i64: 8, 128>}]} {
    %c0 = arith.constant 0 : index
    %c0_0 = arith.constant 0 : index
    %0 = vector.load %arg1[%c0, %c0_0] : memref<8x128xf32, #tpu.memory_space<vmem>>, vector<8x128xf32>
    %c0_1 = arith.constant 0 : index
    %c0_2 = arith.constant 0 : index
    %1 = vector.load %arg2[%c0_1, %c0_2] : memref<8x128xf32, #tpu.memory_space<vmem>>, vector<8x128xf32>
    tpu.vector_store %arg2[%c0_1, %c0_2], %0 {strides = array<i32>} : memref<8x128xf32, #tpu.memory_space<vmem>>, vector<8x128xf32>,
    return
  }
  func.func @transform_0(%arg0: i32) -> (i32, i32) {
    %c0_i32 = arith.constant 0 : i32
    %c0_i32_0 = arith.constant 0 : i32
    %c0_i32_1 = arith.constant 0 : i32
    return %c0_i32, %c0_i32_0 : i32, i32
  }
  func.func @transform_1(%arg0: i32) -> (i32, i32) {
    %c0_i32 = arith.constant 0 : i32
    %c0_i32_0 = arith.constant 0 : i32
    %c0_i32_1 = arith.constant 0 : i32
    return %c0_i32, %c0_i32_0 : i32, i32
  }
}

module attributes {stable_mosaic.version = 11 : i64} {
  func.func @_row_kernel(%arg0: i32, %arg1: memref<16x32xf32, #tpu.memory_space<vmem>>, %arg2: memref<1x32xf32, #tpu.memory_space<vmem>>, %arg3: memref<1x32xf32, #tpu.memory_space<vmem>>, %arg4: memref<32x64xf32, #tpu.memory_space<vmem>>, %arg5: memref<1x64xf32, #tpu.memory_space<vmem>>, %arg6: memref<64x32xf32, #tpu.memory_space<vmem>>, %arg7: memref<1x32xf32, #tpu.memory_space<vmem>>, %arg8: memref<1x32xf32, #tpu.memory_space<vmem>>, %arg9: memref<1x32xf32, #tpu.memory_space<vmem>>, %arg10: memref<32x96xf32, #tpu.memory_space<vmem>>, %arg11: memref<1x96xf32, #tpu.memory_space<vmem>>, %arg12: memref<16x32xf32, #tpu.memory_space<vmem>>, %arg13: memref<16x32xf32, #tpu.memory_space<vmem>>, %arg14: memref<16x32xf32, #tpu.memory_space<vmem>>) attributes {dimension_semantics = [#tpu.dimension_semantics<parallel>], iteration_bounds = array<i64: 1>, scalar_prefetch = 0 : i64, scratch_operands = 0 : i64, tpu.core_type = #tpu.core_type<tc>, window_params = [{transform_indices = @transform_0, window_bounds = array<i64: 16, 32>}, {pipeline_mode = #tpu.pipeline_mode<synchronous>, transform_indices = @transform_1, window_bounds = array<i64: 1, 32>}, {pipeline_mode = #tpu.pipeline_mode<synchronous>, transform_indices = @transform_2, window_bounds = array<i64: 1, 32>}, {pipeline_mode = #tpu.pipeline_mode<synchronous>, transform_indices = @transform_3, window_bounds = array<i64: 32, 64>}, {pipeline_mode = #tpu.pipeline_mode<synchronous>, transform_indices = @transform_4, window_bounds = array<i64: 1, 64>}, {pipeline_mode = #tpu.pipeline_mode<synchronous>, transform_indices = @transform_5, window_bounds = array<i64: 64, 32>}, {pipeline_mode = #tpu.pipeline_mode<synchronous>, transform_indices = @transform_6, window_bounds = array<i64: 1, 32>}, {pipeline_mode = #tpu.pipeline_mode<synchronous>, transform_indices = @transform_7, window_bounds = array<i64: 1, 32>}, {pipeline_mode = #tpu.pipeline_mode<synchronous>, transform_indices = @transform_8, window_bounds = array<i64: 1, 32>}, {pipeline_mode = #tpu.pipeline_mode<synchronous>, transform_indices = @transform_9, window_bounds = array<i64: 32, 96>}, {pipeline_mode = #tpu.pipeline_mode<synchronous>, transform_indices = @transform_10, window_bounds = array<i64: 1, 96>}, {transform_indices = @transform_11, window_bounds = array<i64: 16, 32>}, {transform_indices = @transform_12, window_bounds = array<i64: 16, 32>}, {transform_indices = @transform_13, window_bounds = array<i64: 16, 32>}]} {
    %c0 = arith.constant 0 : index
    %c0_0 = arith.constant 0 : index
    %0 = vector.load %arg1[%c0, %c0_0] : memref<16x32xf32, #tpu.memory_space<vmem>>, vector<16x32xf32>
    %c0_1 = arith.constant 0 : index
    %c0_2 = arith.constant 0 : index
    %1 = vector.load %arg2[%c0_1, %c0_2] : memref<1x32xf32, #tpu.memory_space<vmem>>, vector<1x32xf32>
    %c0_3 = arith.constant 0 : index
    %c0_4 = arith.constant 0 : index
    %2 = vector.load %arg3[%c0_3, %c0_4] : memref<1x32xf32, #tpu.memory_space<vmem>>, vector<1x32xf32>
    %cst = arith.constant dense<0.000000e+00> : vector<16xf32>
    %3 = vector.multi_reduction <add>, %0, %cst [1] : vector<16x32xf32> to vector<16xf32>
    %4 = vector.shape_cast %3 : vector<16xf32> to vector<16x1xf32>
    %cst_5 = arith.constant 3.200000e+01 : f32
    %5 = vector.broadcast %cst_5 : f32 to vector<16x1xf32>
    %6 = arith.divf %4, %5 : vector<16x1xf32>
    %7 = vector.broadcast %6 : vector<16x1xf32> to vector<16x32xf32>
    %8 = arith.subf %0, %7 : vector<16x32xf32>
    %9 = arith.mulf %8, %8 : vector<16x32xf32>
    %cst_6 = arith.constant dense<0.000000e+00> : vector<16xf32>
    %10 = vector.multi_reduction <add>, %9, %cst_6 [1] : vector<16x32xf32> to vector<16xf32>
    %11 = vector.shape_cast %10 : vector<16xf32> to vector<16x1xf32>
    %cst_7 = arith.constant 0.0322580636 : f32
    %12 = vector.broadcast %cst_7 : f32 to vector<16x1xf32>
    %13 = arith.mulf %11, %12 : vector<16x1xf32>
    %14 = math.sqrt %13 : vector<16x1xf32>
    %cst_8 = arith.constant 1.000000e-03 : f32
    %15 = vector.broadcast %cst_8 : f32 to vector<16x1xf32>
    %16 = arith.addf %14, %15 : vector<16x1xf32>
    %cst_9 = arith.constant 1.000000e+00 : f32
    %17 = vector.broadcast %cst_9 : f32 to vector<16x1xf32>
    %18 = arith.divf %17, %16 : vector<16x1xf32>
    %19 = vector.broadcast %18 : vector<16x1xf32> to vector<16x32xf32>
    %20 = arith.mulf %8, %19 : vector<16x32xf32>
    %21 = vector.broadcast %1 : vector<1x32xf32> to vector<16x32xf32>
    %22 = arith.mulf %20, %21 : vector<16x32xf32>
    %23 = vector.broadcast %2 : vector<1x32xf32> to vector<16x32xf32>
    %24 = arith.addf %22, %23 : vector<16x32xf32>
    %c0_10 = arith.constant 0 : index
    %c0_11 = arith.constant 0 : index
    %25 = vector.load %arg4[%c0_10, %c0_11] : memref<32x64xf32, #tpu.memory_space<vmem>>, vector<32x64xf32>
    %cst_12 = arith.constant dense<0.000000e+00> : vector<16x64xf32>
    %26 = tpu.matmul %24, %25, %cst_12 {dimension_numbers = #tpu.dot_dimension_numbers<[1], [0], [0], [1], [0, 0, 1, 1], [], []>} : vector<16x32xf32>, vector<32x64xf32>, vector<16x64xf32> -> vector<16x64xf32>
    %c0_13 = arith.constant 0 : index
    %c0_14 = arith.constant 0 : index
    %27 = vector.load %arg5[%c0_13, %c0_14] : memref<1x64xf32, #tpu.memory_space<vmem>>, vector<1x64xf32>
    %28 = vector.broadcast %27 : vector<1x64xf32> to vector<16x64xf32>
    %29 = arith.addf %26, %28 : vector<16x64xf32>
    %cst_15 = arith.constant 0.000000e+00 : f32
    %30 = vector.broadcast %cst_15 : f32 to vector<16x64xf32>
    %31 = arith.maximumf %29, %30 : vector<16x64xf32>
    %c0_16 = arith.constant 0 : index
    %c0_17 = arith.constant 0 : index
    %32 = vector.load %arg6[%c0_16, %c0_17] : memref<64x32xf32, #tpu.memory_space<vmem>>, vector<64x32xf32>
    %cst_18 = arith.constant dense<0.000000e+00> : vector<16x32xf32>
    %33 = tpu.matmul %31, %32, %cst_18 {dimension_numbers = #tpu.dot_dimension_numbers<[1], [0], [0], [1], [0, 0, 1, 1], [], []>} : vector<16x64xf32>, vector<64x32xf32>, vector<16x32xf32> -> vector<16x32xf32>
    %c0_19 = arith.constant 0 : index
    %c0_20 = arith.constant 0 : index
    %34 = vector.load %arg7[%c0_19, %c0_20] : memref<1x32xf32, #tpu.memory_space<vmem>>, vector<1x32xf32>
    %35 = vector.broadcast %34 : vector<1x32xf32> to vector<16x32xf32>
    %36 = arith.addf %33, %35 : vector<16x32xf32>
    %37 = arith.addf %36, %0 : vector<16x32xf32>
    %c0_21 = arith.constant 0 : index
    %c0_22 = arith.constant 0 : index
    %38 = vector.load %arg8[%c0_21, %c0_22] : memref<1x32xf32, #tpu.memory_space<vmem>>, vector<1x32xf32>
    %c0_23 = arith.constant 0 : index
    %c0_24 = arith.constant 0 : index
    %39 = vector.load %arg9[%c0_23, %c0_24] : memref<1x32xf32, #tpu.memory_space<vmem>>, vector<1x32xf32>
    %cst_25 = arith.constant dense<0.000000e+00> : vector<16xf32>
    %40 = vector.multi_reduction <add>, %37, %cst_25 [1] : vector<16x32xf32> to vector<16xf32>
    %41 = vector.shape_cast %40 : vector<16xf32> to vector<16x1xf32>
    %cst_26 = arith.constant 3.200000e+01 : f32
    %42 = vector.broadcast %cst_26 : f32 to vector<16x1xf32>
    %43 = arith.divf %41, %42 : vector<16x1xf32>
    %44 = vector.broadcast %43 : vector<16x1xf32> to vector<16x32xf32>
    %45 = arith.subf %37, %44 : vector<16x32xf32>
    %46 = arith.mulf %45, %45 : vector<16x32xf32>
    %cst_27 = arith.constant dense<0.000000e+00> : vector<16xf32>
    %47 = vector.multi_reduction <add>, %46, %cst_27 [1] : vector<16x32xf32> to vector<16xf32>
    %48 = vector.shape_cast %47 : vector<16xf32> to vector<16x1xf32>
    %cst_28 = arith.constant 0.0322580636 : f32
    %49 = vector.broadcast %cst_28 : f32 to vector<16x1xf32>
    %50 = arith.mulf %48, %49 : vector<16x1xf32>
    %51 = math.sqrt %50 : vector<16x1xf32>
    %cst_29 = arith.constant 1.000000e-03 : f32
    %52 = vector.broadcast %cst_29 : f32 to vector<16x1xf32>
    %53 = arith.addf %51, %52 : vector<16x1xf32>
    %cst_30 = arith.constant 1.000000e+00 : f32
    %54 = vector.broadcast %cst_30 : f32 to vector<16x1xf32>
    %55 = arith.divf %54, %53 : vector<16x1xf32>
    %56 = vector.broadcast %55 : vector<16x1xf32> to vector<16x32xf32>
    %57 = arith.mulf %45, %56 : vector<16x32xf32>
    %58 = vector.broadcast %38 : vector<1x32xf32> to vector<16x32xf32>
    %59 = arith.mulf %57, %58 : vector<16x32xf32>
    %60 = vector.broadcast %39 : vector<1x32xf32> to vector<16x32xf32>
    %61 = arith.addf %59, %60 : vector<16x32xf32>
    %c0_31 = arith.constant 0 : index
    %c0_32 = arith.constant 0 : index
    %62 = vector.load %arg10[%c0_31, %c0_32] : memref<32x96xf32, #tpu.memory_space<vmem>>, vector<32x96xf32>
    %cst_33 = arith.constant dense<0.000000e+00> : vector<16x96xf32>
    %63 = tpu.matmul %61, %62, %cst_33 {dimension_numbers = #tpu.dot_dimension_numbers<[1], [0], [0], [1], [0, 0, 1, 1], [], []>} : vector<16x32xf32>, vector<32x96xf32>, vector<16x96xf32> -> vector<16x96xf32>
    %c0_34 = arith.constant 0 : index
    %c0_35 = arith.constant 0 : index
    %64 = vector.load %arg11[%c0_34, %c0_35] : memref<1x96xf32, #tpu.memory_space<vmem>>, vector<1x96xf32>
    %65 = vector.broadcast %64 : vector<1x96xf32> to vector<16x96xf32>
    %66 = arith.addf %63, %65 : vector<16x96xf32>
    %67 = vector.extract_strided_slice %66 {offsets = [0, 0], sizes = [16, 32], strides = [1, 1]} : vector<16x96xf32> to vector<16x32xf32>
    %c0_36 = arith.constant 0 : index
    %c0_37 = arith.constant 0 : index
    %68 = vector.load %arg12[%c0_36, %c0_37] : memref<16x32xf32, #tpu.memory_space<vmem>>, vector<16x32xf32>
    tpu.vector_store %arg12[%c0_36, %c0_37], %67 {strides = array<i32>} : memref<16x32xf32, #tpu.memory_space<vmem>>, vector<16x32xf32>,
    %69 = vector.extract_strided_slice %66 {offsets = [0, 32], sizes = [16, 32], strides = [1, 1]} : vector<16x96xf32> to vector<16x32xf32>
    %c0_38 = arith.constant 0 : index
    %c0_39 = arith.constant 0 : index
    %70 = vector.load %arg13[%c0_38, %c0_39] : memref<16x32xf32, #tpu.memory_space<vmem>>, vector<16x32xf32>
    tpu.vector_store %arg13[%c0_38, %c0_39], %69 {strides = array<i32>} : memref<16x32xf32, #tpu.memory_space<vmem>>, vector<16x32xf32>,
    %71 = vector.extract_strided_slice %66 {offsets = [0, 64], sizes = [16, 32], strides = [1, 1]} : vector<16x96xf32> to vector<16x32xf32>
    %c0_40 = arith.constant 0 : index
    %c0_41 = arith.constant 0 : index
    %72 = vector.load %arg14[%c0_40, %c0_41] : memref<16x32xf32, #tpu.memory_space<vmem>>, vector<16x32xf32>
    tpu.vector_store %arg14[%c0_40, %c0_41], %71 {strides = array<i32>} : memref<16x32xf32, #tpu.memory_space<vmem>>, vector<16x32xf32>,
    return
  }
  func.func @transform_0(%arg0: i32) -> (i32, i32) {
    %c0_i32 = arith.constant 0 : i32
    %c0_i32_0 = arith.constant 0 : i32
    return %arg0, %c0_i32 : i32, i32
  }
  func.func @transform_1(%arg0: i32) -> (i32, i32) {
    %c0_i32 = arith.constant 0 : i32
    %c0_i32_0 = arith.constant 0 : i32
    %c0_i32_1 = arith.constant 0 : i32
    return %c0_i32, %c0_i32_0 : i32, i32
  }
  func.func @transform_2(%arg0: i32) -> (i32, i32) {
    %c0_i32 = arith.constant 0 : i32
    %c0_i32_0 = arith.constant 0 : i32
    %c0_i32_1 = arith.constant 0 : i32
    return %c0_i32, %c0_i32_0 : i32, i32
  }
  func.func @transform_3(%arg0: i32) -> (i32, i32) {
    %c0_i32 = arith.constant 0 : i32
    %c0_i32_0 = arith.constant 0 : i32
    %c0_i32_1 = arith.constant 0 : i32
    return %c0_i32, %c0_i32_0 : i32, i32
  }
  func.func @transform_4(%arg0: i32) -> (i32, i32) {
    %c0_i32 = arith.constant 0 : i32
    %c0_i32_0 = arith.constant 0 : i32
    %c0_i32_1 = arith.constant 0 : i32
    return %c0_i32, %c0_i32_0 : i32, i32
  }
  func.func @transform_5(%arg0: i32) -> (i32, i32) {
    %c0_i32 = arith.constant 0 : i32
    %c0_i32_0 = arith.constant 0 : i32
    %c0_i32_1 = arith.constant 0 : i32
    return %c0_i32, %c0_i32_0 : i32, i32
  }
  func.func @transform_6(%arg0: i32) -> (i32, i32) {
    %c0_i32 = arith.constant 0 : i32
    %c0_i32_0 = arith.constant 0 : i32
    %c0_i32_1 = arith.constant 0 : i32
    return %c0_i32, %c0_i32_0 : i32, i32
  }
  func.func @transform_7(%arg0: i32) -> (i32, i32) {
    %c0_i32 = arith.constant 0 : i32
    %c0_i32_0 = arith.constant 0 : i32
    %c0_i32_1 = arith.constant 0 : i32
    return %c0_i32, %c0_i32_0 : i32, i32
  }
  func.func @transform_8(%arg0: i32) -> (i32, i32) {
    %c0_i32 = arith.constant 0 : i32
    %c0_i32_0 = arith.constant 0 : i32
    %c0_i32_1 = arith.constant 0 : i32
    return %c0_i32, %c0_i32_0 : i32, i32
  }
  func.func @transform_9(%arg0: i32) -> (i32, i32) {
    %c0_i32 = arith.constant 0 : i32
    %c0_i32_0 = arith.constant 0 : i32
    %c0_i32_1 = arith.constant 0 : i32
    return %c0_i32, %c0_i32_0 : i32, i32
  }
  func.func @transform_10(%arg0: i32) -> (i32, i32) {
    %c0_i32 = arith.constant 0 : i32
    %c0_i32_0 = arith.constant 0 : i32
    %c0_i32_1 = arith.constant 0 : i32
    return %c0_i32, %c0_i32_0 : i32, i32
  }
  func.func @transform_11(%arg0: i32) -> (i32, i32) {
    %c0_i32 = arith.constant 0 : i32
    %c0_i32_0 = arith.constant 0 : i32
    return %arg0, %c0_i32 : i32, i32
  }
  func.func @transform_12(%arg0: i32) -> (i32, i32) {
    %c0_i32 = arith.constant 0 : i32
    %c0_i32_0 = arith.constant 0 : i32
    return %arg0, %c0_i32 : i32, i32
  }
  func.func @transform_13(%arg0: i32) -> (i32, i32) {
    %c0_i32 = arith.constant 0 : i32
    %c0_i32_0 = arith.constant 0 : i32
    return %arg0, %c0_i32 : i32, i32
  }
}

</mosaic_0001>

<llo_original>
// kernel: tpu_custom_call.1
$region0: #{tpu_custom_call.1}
  #allocation0 [shape = 'u32[]', space=smem, size = 0x4, offset = 0x4, fixed_abs, tag = 'smem constant byte address 0x4 - core index']
  #allocation1 [shape = 'u32[144,128]{1,0:T(1,128)}', space=vmem, size = 0x12000, scoped, tag = 'internal scratch']
  %s0 = inlined_call_operand.hbm [shape: f32[8,128], index: 0, kind: input, shape index: {}]
  %s1 = inlined_call_operand.hbm [shape: f32[8,128], index: 1, kind: output, shape index: {}]
  %s2 = sld [smem:[#allocation0]]
  $region41: #{tpu_custom_call.1} parent=0
    _
  %s4 = ssub.s32 1, %s2
  %s5 = scalar_select 0, %s4, %s2
  $region1: #{tpu_custom_call.1} parent=0
    #allocation2 [shape = 'u8[4096]{0}', space=vmem, size = 0x1000, scoped, tag = 'input window, operand 0, single buffered']
    #allocation3 [shape = 's32[2]{0}', space=sflag, size = 0x8, scoped, tag = 'scoped memory for tpu_custom_call.1']
    #allocation4 [shape = 's32[2]{0}', space=sflag, size = 0x8, scoped, tag = 'scoped memory for tpu_custom_call.1']
    #allocation5 [shape = 'u8[4096]{0}', space=vmem, size = 0x1000, scoped, tag = 'output window, operand 0, single buffered']
    %6 = vsyncpa [#allocation3], 0
    %7 = vsyncpa [#allocation4], 0
    loop: start=0, step=1, limit=4
    $region2: #{tpu_custom_call.1} parent=1 // loop_pre_header
      _
    $region3: #{tpu_custom_call.1} parent=1 // loop_header
      %s9 = sphi 0, %s13
      %p10 = scmp.ge.s32.totalorder %s9, 4
      %s17 = sphi 0, %s17
      %s19 = sphi 0, %s17
      %s20 = sphi 0, %s19
      %s34 = sphi 0, %s20
      %s38 = sphi 0, %s38
      %s40 = sphi 0, %s38
      %s41 = sphi 0, %s40
      %s55 = sphi 0, %s41
    $region4: #{tpu_custom_call.1} parent=1 // loop_header_branch
      %12 = sbr.rel (%p10) target = $region8
    $region5: #{tpu_custom_call.1} parent=1 // loop_body
      %s14 = ssub.s32 %s9, 1
      %s15 = ssub.s32 %s9, 2
      %s16 = sadd.s32 %s9, 1
      %s18 = sadd.s32 %s17, 1
      %p21 = scmp.eq.s32.totalorder %s9, 1
      %p22 = scmp.ne.s32.totalorder %s17, %s19
      %p23 = scmp.eq.s32.totalorder %s9, 0
      %p24 = por %p22, %p23
      %p25 = scmp.ne.s32.totalorder %s17, %s19
      %p26 = scmp.eq.s32.totalorder %s14, 1
      %p27 = por %p25, %p26
      %p28 = scmp.ne.s32.totalorder %s19, %s20
      %p29 = scmp.eq.s32.totalorder %s14, 0
      %p30 = por %p28, %p29
      %p31 = scmp.ne.s32.totalorder %s19, %s20
      %p32 = scmp.eq.s32.totalorder %s15, 1
      %p33 = por %p31, %p32
      %p35 = scmp.ne.s32.totalorder %s20, %s34
      %p36 = scmp.eq.s32.totalorder %s15, 0
      %p37 = por %p35, %p36
      %s39 = sadd.s32 %s38, 1
      %p42 = scmp.eq.s32.totalorder %s9, 1
      %p43 = scmp.ne.s32.totalorder %s38, %s40
      %p44 = scmp.eq.s32.totalorder %s9, 0
      %p45 = por %p43, %p44
      %p46 = scmp.ne.s32.totalorder %s38, %s40
      %p47 = scmp.eq.s32.totalorder %s14, 1
      %p48 = por %p46, %p47
      %p49 = scmp.ne.s32.totalorder %s40, %s41
      %p50 = scmp.eq.s32.totalorder %s14, 0
      %p51 = por %p49, %p50
      %p52 = scmp.ne.s32.totalorder %s40, %s41
      %p53 = scmp.eq.s32.totalorder %s15, 1
      %p54 = por %p52, %p53
      %p56 = scmp.ne.s32.totalorder %s41, %s55
      %p57 = scmp.eq.s32.totalorder %s15, 0
      %p58 = por %p56, %p57
      %p59 = scmp.le.s32.totalorder 1, %s9
      %p60 = scmp.lt.s32.totalorder %s9, 3
      %p61 = pnand %p59, %p60
      %p62 = pneg %p61
      // Predicated region
      $region9: #{tpu_custom_call.1} parent=5 // pred_check
        _
      $region10: #{tpu_custom_call.1} parent=5 // pred_check_branch
        %64 = sbr.rel (%p61) target = $region12
      $region11: #{tpu_custom_call.1} parent=5 // pred_region
        %s65 = ssub.s32 %s9, 1
        // Predicated region
        $region13: #{tpu_custom_call.1} parent=11 // pred_check
          %p66 = pneg %p30
        $region14: #{tpu_custom_call.1} parent=11 // pred_check_branch
          %68 = sbr.rel (%p66) target = $region16
        $region15: #{tpu_custom_call.1} parent=11 // pred_region
          %s70 = ssub.s32 128, 128
          %71 = vsyncadd [#allocation3], %s70
          %s73 = sshll.u32 [#allocation2], 4
          %s74 = int_to_ptr.vmem [resolvable:$true] %s73
          %76 = dma.hbm_to_vmem [thread:$0]  %s0, 128, %s74, [#allocation3]
        $region16: #{tpu_custom_call.1} parent=11 // pred_fallthru
          _
      $region12: #{tpu_custom_call.1} parent=5 // pred_fallthru
        _
      %p77 = scmp.lt.s32.totalorder %s9, 2
      // Predicated region
      $region17: #{tpu_custom_call.1} parent=5 // pred_check
        %p78 = pneg %p77
      $region18: #{tpu_custom_call.1} parent=5 // pred_check_branch
        %80 = sbr.rel (%p78) target = $region20
      $region19: #{tpu_custom_call.1} parent=5 // pred_region
        _
      $region20: #{tpu_custom_call.1} parent=5 // pred_fallthru
        _
      %p81 = scmp.le.s32.totalorder 1, %s9
      %p82 = scmp.lt.s32.totalorder %s9, 3
      %p83 = pnand %p81, %p82
      %p84 = pneg %p83
      // Predicated region
      $region21: #{tpu_custom_call.1} parent=5 // pred_check
        _
      $region22: #{tpu_custom_call.1} parent=5 // pred_check_branch
        %86 = sbr.rel (%p83) target = $region24
      $region23: #{tpu_custom_call.1} parent=5 // pred_region
        %s87 = ssub.s32 %s9, 1
        // Predicated region
        $region25: #{tpu_custom_call.1} parent=23 // pred_check
          %p88 = pneg %p30
        $region26: #{tpu_custom_call.1} parent=23 // pred_check_branch
          %90 = sbr.rel (%p88) target = $region28
        $region27: #{tpu_custom_call.1} parent=23 // pred_region
          %91 = dma.done [#allocation3], 128
        $region28: #{tpu_custom_call.1} parent=23 // pred_fallthru
          _
        %p92 = pneg %p30
        %p93 = pneg %p27
        %p94 = pneg %p51
        %p95 = pneg %p48
        %v96 = vld [vmem:[#allocation2] sm:$0xff]
        %97 = vst [vmem:[#allocation5] sm:$0xff] %v96
        // Predicated region
        $region29: #{tpu_custom_call.1} parent=23 // pred_check
          %p98 = pneg %p48
        $region30: #{tpu_custom_call.1} parent=23 // pred_check_branch
          %100 = sbr.rel (%p98) target = $region32
        $region31: #{tpu_custom_call.1} parent=23 // pred_region
          %s102 = ssub.s32 128, 128
          %103 = vsyncadd [#allocation4], %s102
          %s105 = sshll.u32 [#allocation5], 4
          %s106 = int_to_ptr.vmem [resolvable:$true] %s105
          %108 = dma.vmem_to_hbm [thread:$0]  %s106, 128, %s1, [#allocation4]
        $region32: #{tpu_custom_call.1} parent=23 // pred_fallthru
          _
        // Predicated region
        $region33: #{tpu_custom_call.1} parent=23 // pred_check
          %p109 = pneg %p48
        $region34: #{tpu_custom_call.1} parent=23 // pred_check_branch
          %111 = sbr.rel (%p109) target = $region36
        $region35: #{tpu_custom_call.1} parent=23 // pred_region
          %112 = dma.done [#allocation4], 128
        $region36: #{tpu_custom_call.1} parent=23 // pred_fallthru
          _
      $region24: #{tpu_custom_call.1} parent=5 // pred_fallthru
        _
      %p113 = scmp.le.s32.totalorder 2, %s9
      // Predicated region
      $region37: #{tpu_custom_call.1} parent=5 // pred_check
        %p114 = pneg %p113
      $region38: #{tpu_custom_call.1} parent=5 // pred_check_branch
        %116 = sbr.rel (%p114) target = $region40
      $region39: #{tpu_custom_call.1} parent=5 // pred_region
        %s117 = ssub.s32 %s9, 2
      $region40: #{tpu_custom_call.1} parent=5 // pred_fallthru
        _
    $region6: #{tpu_custom_call.1} parent=1 // loop_footer
      %s13 = sadd.s32 1, %s9
    $region7: #{tpu_custom_call.1} parent=1 // loop_footer_branch
      %8 = sbr.rel target = $region3
    $region8: #{tpu_custom_call.1} parent=1 // loop_exit
      _
    %118 = vsyncpa [#allocation3], 1
    %s119 = scalar_lea.sflag [#allocation3], 1
    %120 = vsyncpa %s119, 1
    %121 = vsyncpa [#allocation4], 1
    %s122 = scalar_lea.sflag [#allocation4], 1
    %123 = vsyncpa %s122, 1

// kernel: tpu_custom_call.1
$region0: #{tpu_custom_call.1}
  #allocation0 [shape = 'u32[]', space=smem, size = 0x4, offset = 0x4, fixed_abs, tag = 'smem constant byte address 0x4 - core index']
  #allocation1 [shape = 'u32[144,128]{1,0:T(1,128)}', space=vmem, size = 0x12000, scoped, tag = 'internal scratch']
  %s0 = inlined_call_operand.vmem [shape: f32[16,32], index: 0, kind: input, shape index: {}]
  %s1 = inlined_call_operand.vmem [shape: f32[1,32], index: 1, kind: input, shape index: {}]
  %s2 = inlined_call_operand.vmem [shape: f32[1,32], index: 2, kind: input, shape index: {}]
  %s3 = inlined_call_operand.vmem [shape: f32[32,64], index: 3, kind: input, shape index: {}]
  %s4 = inlined_call_operand.vmem [shape: f32[1,64], index: 4, kind: input, shape index: {}]
  %s5 = inlined_call_operand.vmem [shape: f32[64,32], index: 5, kind: input, shape index: {}]
  %s6 = inlined_call_operand.vmem [shape: f32[1,32], index: 6, kind: input, shape index: {}]
  %s7 = inlined_call_operand.vmem [shape: f32[1,32], index: 7, kind: input, shape index: {}]
  %s8 = inlined_call_operand.vmem [shape: f32[1,32], index: 8, kind: input, shape index: {}]
  %s9 = inlined_call_operand.vmem [shape: f32[32,96], index: 9, kind: input, shape index: {}]
  %s10 = inlined_call_operand.vmem [shape: f32[1,96], index: 10, kind: input, shape index: {}]
  %s11 = inlined_call_operand.hbm [shape: f32[16,32], index: 11, kind: output, shape index: {0}]
  %s12 = inlined_call_operand.hbm [shape: f32[16,32], index: 12, kind: output, shape index: {1}]
  %s13 = inlined_call_operand.hbm [shape: f32[16,32], index: 13, kind: output, shape index: {2}]
  %14 = xla_tuple %s11, %s12, %s13
  %s15 = sld [smem:[#allocation0]]
  $region70: #{tpu_custom_call.1} parent=0
    _
  %s17 = ssub.s32 1, %s15
  %s18 = scalar_select 0, %s17, %s15
  $region1: #{tpu_custom_call.1} parent=0
    #allocation2 [shape = 'u8[8192]{0}', space=vmem, size = 0x2000, scoped, tag = 'output window, operand 0, single buffered']
    #allocation3 [shape = 's32[1]{0}', space=sflag, size = 0x4, scoped, tag = 'scoped memory for tpu_custom_call.1']
    #allocation4 [shape = 'u8[8192]{0}', space=vmem, size = 0x2000, scoped, tag = 'output window, operand 1, single buffered']
    #allocation5 [shape = 's32[1]{0}', space=sflag, size = 0x4, scoped, tag = 'scoped memory for tpu_custom_call.1']
    #allocation6 [shape = 'u8[8192]{0}', space=vmem, size = 0x2000, scoped, tag = 'output window, operand 2, single buffered']
    %19 = vsyncpa [#allocation3], 0
    %20 = vsyncpa [#allocation5], 0
    // Predicated region
    $region2: #{tpu_custom_call.1} parent=1 // pred_check
      _
    $region3: #{tpu_custom_call.1} parent=1 // pred_check_branch
      %22 = sbr.rel (0) target = $region5
    $region4: #{tpu_custom_call.1} parent=1 // pred_region
      _
    $region5: #{tpu_custom_call.1} parent=1 // pred_fallthru
      _
    // Predicated region
    $region6: #{tpu_custom_call.1} parent=1 // pred_check
      _
    $region7: #{tpu_custom_call.1} parent=1 // pred_check_branch
      %24 = sbr.rel (0) target = $region9
    $region8: #{tpu_custom_call.1} parent=1 // pred_region
      _
    $region9: #{tpu_custom_call.1} parent=1 // pred_fallthru
      _
    // Predicated region
    $region10: #{tpu_custom_call.1} parent=1 // pred_check
      _
    $region11: #{tpu_custom_call.1} parent=1 // pred_check_branch
      %26 = sbr.rel (0) target = $region13
    $region12: #{tpu_custom_call.1} parent=1 // pred_region
      _
    $region13: #{tpu_custom_call.1} parent=1 // pred_fallthru
      _
    // Predicated region
    $region14: #{tpu_custom_call.1} parent=1 // pred_check
      _
    $region15: #{tpu_custom_call.1} parent=1 // pred_check_branch
      %28 = sbr.rel (0) target = $region17
    $region16: #{tpu_custom_call.1} parent=1 // pred_region
      _
    $region17: #{tpu_custom_call.1} parent=1 // pred_fallthru
      _
    // Predicated region
    $region18: #{tpu_custom_call.1} parent=1 // pred_check
      _
    $region19: #{tpu_custom_call.1} parent=1 // pred_check_branch
      %30 = sbr.rel (0) target = $region21
    $region20: #{tpu_custom_call.1} parent=1 // pred_region
      _
    $region21: #{tpu_custom_call.1} parent=1 // pred_fallthru
      _
    // Predicated region
    $region22: #{tpu_custom_call.1} parent=1 // pred_check
      _
    $region23: #{tpu_custom_call.1} parent=1 // pred_check_branch
      %32 = sbr.rel (0) target = $region25
    $region24: #{tpu_custom_call.1} parent=1 // pred_region
      _
    $region25: #{tpu_custom_call.1} parent=1 // pred_fallthru
      _
    // Predicated region
    $region26: #{tpu_custom_call.1} parent=1 // pred_check
      _
    $region27: #{tpu_custom_call.1} parent=1 // pred_check_branch
      %34 = sbr.rel (0) target = $region29
    $region28: #{tpu_custom_call.1} parent=1 // pred_region
      _
    $region29: #{tpu_custom_call.1} parent=1 // pred_fallthru
      _
    // Predicated region
    $region30: #{tpu_custom_call.1} parent=1 // pred_check
      _
    $region31: #{tpu_custom_call.1} parent=1 // pred_check_branch
      %36 = sbr.rel (0) target = $region33
    $region32: #{tpu_custom_call.1} parent=1 // pred_region
      _
    $region33: #{tpu_custom_call.1} parent=1 // pred_fallthru
      _
    // Predicated region
    $region34: #{tpu_custom_call.1} parent=1 // pred_check
      _
    $region35: #{tpu_custom_call.1} parent=1 // pred_check_branch
      %38 = sbr.rel (0) target = $region37
    $region36: #{tpu_custom_call.1} parent=1 // pred_region
      _
    $region37: #{tpu_custom_call.1} parent=1 // pred_fallthru
      _
    // Predicated region
    $region38: #{tpu_custom_call.1} parent=1 // pred_check
      _
    $region39: #{tpu_custom_call.1} parent=1 // pred_check_branch
      %40 = sbr.rel (0) target = $region41
    $region40: #{tpu_custom_call.1} parent=1 // pred_region
      _
    $region41: #{tpu_custom_call.1} parent=1 // pred_fallthru
      _
    // Predicated region
    $region42: #{tpu_custom_call.1} parent=1 // pred_check
      _
    $region43: #{tpu_custom_call.1} parent=1 // pred_check_branch
      %42 = sbr.rel (0) target = $region45
    $region44: #{tpu_custom_call.1} parent=1 // pred_region
      _
    $region45: #{tpu_custom_call.1} parent=1 // pred_fallthru
      _
    %v43 = vld [vmem:[%s0] sm:$0xff]
    %v44 = vld [vmem:[%s0 + $0x8] sm:$0xff]
    %v45 = vld [vmem:[%s1] sm:$0x1]
    %v46 = vld [vmem:[%s2] sm:$0x1]
    %vm47 = vcmask 261120
    %v48 = vsel %vm47, %v43, 0.0
    %49 = vadd.xlane.f32.xlu0 %v48
    %v50 = vpop.xlane.xlu0 %49
    %v51 = vsel %vm47, %v44, 0.0
    %52 = vadd.xlane.f32.xlu0 %v51
    %v53 = vpop.xlane.xlu0 %52
    %v54 = vrcp.pop 32.0
    %v55 = vmul.f32 %v50, %v54
    %v56 = vmul.f32 %v53, %v54
    %v57 = vsub.f32 %v43, %v55
    %v58 = vsub.f32 %v44, %v56
    %v59 = vmul.f32 %v57, %v57
    %v60 = vmul.f32 %v58, %v58
    %v61 = vsel %vm47, %v59, 0.0
    %62 = vadd.xlane.f32.xlu0 %v61
    %v63 = vpop.xlane.xlu0 %62
    %v64 = vsel %vm47, %v60, 0.0
    %65 = vadd.xlane.f32.xlu0 %v64
    %v66 = vpop.xlane.xlu0 %65
    %v67 = vmul.f32 %v63, 0.032258064
    %v68 = vmul.f32 %v66, 0.032258064
    %v69 = vrsqrt.pop %v67
    %v70 = vmul.f32 %v67, %v69
    %vm71 = vcmp.eq.f32.partialorder %v67, inf
    %v72 = vsel %vm71, %v67, %v70
    %vm73 = vcmp.eq.f32.partialorder %v67, 0.0
    %v74 = vand.u32 %v67, 2147483648
    %v75 = vsel %vm73, %v74, %v72
    %v76 = vrsqrt.pop %v68
    %v77 = vmul.f32 %v68, %v76
    %vm78 = vcmp.eq.f32.partialorder %v68, inf
    %v79 = vsel %vm78, %v68, %v77
    %vm80 = vcmp.eq.f32.partialorder %v68, 0.0
    %v81 = vand.u32 %v68, 2147483648
    %v82 = vsel %vm80, %v81, %v79
    %v83 = vadd.f32 %v75, 0.001
    %v84 = vadd.f32 %v82, 0.001
    %v85 = vrcp.pop %v83
    %v86 = vmul.f32 1.0, %v85
    %v87 = vrcp.pop %v84
    %v88 = vmul.f32 1.0, %v87
    %v89 = vmul.f32 %v57, %v86
    %v90 = vmul.f32 %v58, %v88
    %v92 = vlaneseq
    %v93 = vshrl.u32 %v92, 7
    %v94 = vsub.s32 0, %v93
    %v95 = vrot.slane %v45, %v94
    %v97 = vmul.f32 %v89, %v95
    %v98 = vmul.f32 %v90, %v95
    %v100 = vlaneseq
    %v101 = vshrl.u32 %v100, 7
    %v102 = vsub.s32 0, %v101
    %v103 = vrot.slane %v46, %v102
    %v105 = vadd.f32 %v97, %v103
    %v106 = vadd.f32 %v98, %v103
    %v107 = vld [vmem:[%s3] sm:$0xff]
    %v108 = vld [vmem:[%s3 + $0x8] sm:$0xff]
    %v109 = vld [vmem:[%s3 + $0x10] sm:$0xff]
    %v110 = vld [vmem:[%s3 + $0x18] sm:$0xff]
    %v111 = vld [vmem:[%s4] sm:$0x1]
    %v113 = vlaneseq
    %v114 = vshrl.u32 %v113, 7
    %v115 = vsub.s32 0, %v114
    %v116 = vrot.slane %v111, %v115
    %v119 = vsel %vm47, %v105, 0
    %v122 = vsel %vm47, %v106, 0
    %124 = vmatprep.subr.mxu0 0.0
    %125 = vmatpush1.msra.mxu0 %v107
    %126 = vmatprep.subr.mxu0 0.0
    %127 = vmatpush1.msra.mxu0 %v108
    %128 = vmatprep.subr.mxu0 0.0
    %129 = vmatpush1.msra.mxu0 %v109
    %130 = vmatprep.subr.mxu0 0.0
    %131 = vmatpush1.msra.mxu0 %v110
    %132 = vmatprep.subr.mxu0 0.0
    %133 = vmatpush1.msra.mxu0 0.0
    %134 = vmatprep.subr.mxu0 0.0
    %135 = vmatpush1.msra.mxu0 0.0
    %136 = vmatprep.subr.mxu0 0.0
    %137 = vmatpush1.msra.mxu0 0.0
    %138 = vmatprep.subr.mxu0 0.0
    %139 = vmatpush1.msra.mxu0 0.0
    %140 = vmatprep.subr.mxu0 0.0
    %141 = vmatpush1.msra.mxu0 0.0
    %142 = vmatprep.subr.mxu0 0.0
    %143 = vmatpush1.msra.mxu0 0.0
    %144 = vmatprep.subr.mxu0 0.0
    %145 = vmatpush1.msra.mxu0 0.0
    %146 = vmatprep.subr.mxu0 0.0
    %147 = vmatpush1.msra.mxu0 0.0
    %148 = vmatprep.subr.mxu0 0.0
    %149 = vmatpush1.msra.mxu0 0.0
    %150 = vmatprep.subr.mxu0 0.0
    %151 = vmatpush1.msra.mxu0 0.0
    %152 = vmatprep.subr.mxu0 0.0
    %153 = vmatpush1.msra.mxu0 0.0
    %154 = vmatprep.subr.mxu0 0.0
    %155 = vmatpush1.msra.mxu0 0.0
    %156 = vmatprep.subr.mxu0 0.0
    %157 = vmatpush1.msra.mxu0 0.0
    %158 = vmatprep.subr.mxu0 0.0
    %159 = vmatpush1.msra.mxu0 0.0
    %160 = vmatprep.subr.mxu0 0.0
    %161 = vmatpush1.msra.mxu0 0.0
    %162 = vmatprep.subr.mxu0 0.0
    %163 = vmatpush1.msra.mxu0 0.0
    %164 = vmatprep.subr.mxu0 0.0
    %165 = vmatpush1.msra.mxu0 0.0
    %166 = vmatprep.subr.mxu0 0.0
    %167 = vmatpush1.msra.mxu0 0.0
    %168 = vmatprep.subr.mxu0 0.0
    %169 = vmatpush1.msra.mxu0 0.0
    %170 = vmatprep.subr.mxu0 0.0
    %171 = vmatpush1.msra.mxu0 0.0
    %172 = vmatprep.subr.mxu0 0.0
    %173 = vmatpush1.msra.mxu0 0.0
    %174 = vmatprep.subr.mxu0 0.0
    %175 = vmatpush1.msra.mxu0 0.0
    %176 = vmatprep.subr.mxu0 0.0
    %177 = vmatpush1.msra.mxu0 0.0
    %178 = vmatprep.subr.mxu0 0.0
    %179 = vmatpush1.msra.mxu0 0.0
    %180 = vmatprep.subr.mxu0 0.0
    %181 = vmatpush1.msra.mxu0 0.0
    %182 = vmatprep.subr.mxu0 0.0
    %183 = vmatpush1.msra.mxu0 0.0
    %184 = vmatprep.subr.mxu0 0.0
    %185 = vmatpush1.msra.mxu0 0.0
    %186 = vmatprep.subr.mxu0 0.0
    %187 = vmatpush1.msra.mxu0 0.0
    %188 = vmatprep.mubr.f32.mxu0 0.0
    %189 = vmatmul.mubr.f32.gmra.mrb[0].mxu0 %v119
    %v190 = vpop.f32.mrb[0].mxu0
    %v191 = vadd.f32 %v116, %v190
    %v192 = vpop.f32.mrb[0].mxu0
    %193 = vmatprep.mubr.f32.mxu0 0.0
    %194 = vmatmul.mubr.f32.gmra.mrb[0].mxu0 %v122
    %v195 = vpop.f32.mrb[0].mxu0
    %v196 = vadd.f32 %v116, %v195
    %v197 = vpop.f32.mrb[0].mxu0
    %198 = vdwg.mxu0
    %v199 = vmax.f32 %v191, 0.0
    %v200 = vmax.f32 %v196, 0.0
    %v201 = vld [vmem:[%s5] sm:$0xff]
    %v202 = vld [vmem:[%s5 + $0x8] sm:$0xff]
    %v203 = vld [vmem:[%s5 + $0x10] sm:$0xff]
    %v204 = vld [vmem:[%s5 + $0x18] sm:$0xff]
    %v205 = vld [vmem:[%s5 + $0x20] sm:$0xff]
    %v206 = vld [vmem:[%s5 + $0x28] sm:$0xff]
    %v207 = vld [vmem:[%s5 + $0x30] sm:$0xff]
    %v208 = vld [vmem:[%s5 + $0x38] sm:$0xff]
    %v209 = vld [vmem:[%s6] sm:$0x1]
    %v211 = vlaneseq
    %v212 = vshrl.u32 %v211, 7
    %v213 = vsub.s32 0, %v212
    %v214 = vrot.slane %v209, %v213
    %vm216 = vcmask 523264
    %v218 = vsel %vm216, %v199, 0
    %v221 = vsel %vm216, %v200, 0
    %223 = vmatprep.subr.mxu0 0.0
    %224 = vmatpush1.msra.mxu0 %v201
    %225 = vmatprep.subr.mxu0 0.0
    %226 = vmatpush1.msra.mxu0 %v202
    %227 = vmatprep.subr.mxu0 0.0
    %228 = vmatpush1.msra.mxu0 %v203
    %229 = vmatprep.subr.mxu0 0.0
    %230 = vmatpush1.msra.mxu0 %v204
    %231 = vmatprep.subr.mxu0 0.0
    %232 = vmatpush1.msra.mxu0 %v205
    %233 = vmatprep.subr.mxu0 0.0
    %234 = vmatpush1.msra.mxu0 %v206
    %235 = vmatprep.subr.mxu0 0.0
    %236 = vmatpush1.msra.mxu0 %v207
    %237 = vmatprep.subr.mxu0 0.0
    %238 = vmatpush1.msra.mxu0 %v208
    %239 = vmatprep.subr.mxu0 0.0
    %240 = vmatpush1.msra.mxu0 0.0
    %241 = vmatprep.subr.mxu0 0.0
    %242 = vmatpush1.msra.mxu0 0.0
    %243 = vmatprep.subr.mxu0 0.0
    %244 = vmatpush1.msra.mxu0 0.0
    %245 = vmatprep.subr.mxu0 0.0
    %246 = vmatpush1.msra.mxu0 0.0
    %247 = vmatprep.subr.mxu0 0.0
    %248 = vmatpush1.msra.mxu0 0.0
    %249 = vmatprep.subr.mxu0 0.0
    %250 = vmatpush1.msra.mxu0 0.0
    %251 = vmatprep.subr.mxu0 0.0
    %252 = vmatpush1.msra.mxu0 0.0
    %253 = vmatprep.subr.mxu0 0.0
    %254 = vmatpush1.msra.mxu0 0.0
    %255 = vmatprep.subr.mxu0 0.0
    %256 = vmatpush1.msra.mxu0 0.0
    %257 = vmatprep.subr.mxu0 0.0
    %258 = vmatpush1.msra.mxu0 0.0
    %259 = vmatprep.subr.mxu0 0.0
    %260 = vmatpush1.msra.mxu0 0.0
    %261 = vmatprep.subr.mxu0 0.0
    %262 = vmatpush1.msra.mxu0 0.0
    %263 = vmatprep.subr.mxu0 0.0
    %264 = vmatpush1.msra.mxu0 0.0
    %265 = vmatprep.subr.mxu0 0.0
    %266 = vmatpush1.msra.mxu0 0.0
    %267 = vmatprep.subr.mxu0 0.0
    %268 = vmatpush1.msra.mxu0 0.0
    %269 = vmatprep.subr.mxu0 0.0
    %270 = vmatpush1.msra.mxu0 0.0
    %271 = vmatprep.subr.mxu0 0.0
    %272 = vmatpush1.msra.mxu0 0.0
    %273 = vmatprep.subr.mxu0 0.0
    %274 = vmatpush1.msra.mxu0 0.0
    %275 = vmatprep.subr.mxu0 0.0
    %276 = vmatpush1.msra.mxu0 0.0
    %277 = vmatprep.subr.mxu0 0.0
    %278 = vmatpush1.msra.mxu0 0.0
    %279 = vmatprep.subr.mxu0 0.0
    %280 = vmatpush1.msra.mxu0 0.0
    %281 = vmatprep.subr.mxu0 0.0
    %282 = vmatpush1.msra.mxu0 0.0
    %283 = vmatprep.subr.mxu0 0.0
    %284 = vmatpush1.msra.mxu0 0.0
    %285 = vmatprep.subr.mxu0 0.0
    %286 = vmatpush1.msra.mxu0 0.0
    %287 = vmatprep.mubr.f32.mxu0 0.0
    %288 = vmatmul.mubr.f32.gmra.mrb[0].mxu0 %v218
    %v289 = vpop.f32.mrb[0].mxu0
    %v290 = vadd.f32 %v214, %v289
    %v291 = vpop.f32.mrb[0].mxu0
    %292 = vmatprep.mubr.f32.mxu0 0.0
    %293 = vmatmul.mubr.f32.gmra.mrb[0].mxu0 %v221
    %v294 = vpop.f32.mrb[0].mxu0
    %v295 = vadd.f32 %v214, %v294
    %v296 = vpop.f32.mrb[0].mxu0
    %297 = vdwg.mxu0
    %v298 = vadd.f32 %v290, %v43
    %v299 = vadd.f32 %v295, %v44
    %v300 = vld [vmem:[%s7] sm:$0x1]
    %v301 = vld [vmem:[%s8] sm:$0x1]
    %v302 = vsel %vm47, %v298, 0.0
    %303 = vadd.xlane.f32.xlu0 %v302
    %v304 = vpop.xlane.xlu0 %303
    %v305 = vsel %vm47, %v299, 0.0
    %306 = vadd.xlane.f32.xlu0 %v305
    %v307 = vpop.xlane.xlu0 %306
    %v308 = vmul.f32 %v304, %v54
    %v309 = vmul.f32 %v307, %v54
    %v310 = vsub.f32 %v298, %v308
    %v311 = vsub.f32 %v299, %v309
    %v312 = vmul.f32 %v310, %v310
    %v313 = vmul.f32 %v311, %v311
    %v314 = vsel %vm47, %v312, 0.0
    %315 = vadd.xlane.f32.xlu0 %v314
    %v316 = vpop.xlane.xlu0 %315
    %v317 = vsel %vm47, %v313, 0.0
    %318 = vadd.xlane.f32.xlu0 %v317
    %v319 = vpop.xlane.xlu0 %318
    %v320 = vmul.f32 %v316, 0.032258064
    %v321 = vmul.f32 %v319, 0.032258064
    %v322 = vrsqrt.pop %v320
    %v323 = vmul.f32 %v320, %v322
    %vm324 = vcmp.eq.f32.partialorder %v320, inf
    %v325 = vsel %vm324, %v320, %v323
    %vm326 = vcmp.eq.f32.partialorder %v320, 0.0
    %v327 = vand.u32 %v320, 2147483648
    %v328 = vsel %vm326, %v327, %v325
    %v329 = vrsqrt.pop %v321
    %v330 = vmul.f32 %v321, %v329
    %vm331 = vcmp.eq.f32.partialorder %v321, inf
    %v332 = vsel %vm331, %v321, %v330
    %vm333 = vcmp.eq.f32.partialorder %v321, 0.0
    %v334 = vand.u32 %v321, 2147483648
    %v335 = vsel %vm333, %v334, %v332
    %v336 = vadd.f32 %v328, 0.001
    %v337 = vadd.f32 %v335, 0.001
    %v338 = vrcp.pop %v336
    %v339 = vmul.f32 1.0, %v338
    %v340 = vrcp.pop %v337
    %v341 = vmul.f32 1.0, %v340
    %v342 = vmul.f32 %v310, %v339
    %v343 = vmul.f32 %v311, %v341
    %v345 = vlaneseq
    %v346 = vshrl.u32 %v345, 7
    %v347 = vsub.s32 0, %v346
    %v348 = vrot.slane %v300, %v347
    %v350 = vmul.f32 %v342, %v348
    %v351 = vmul.f32 %v343, %v348
    %v353 = vlaneseq
    %v354 = vshrl.u32 %v353, 7
    %v355 = vsub.s32 0, %v354
    %v356 = vrot.slane %v301, %v355
    %v358 = vadd.f32 %v350, %v356
    %v359 = vadd.f32 %v351, %v356
    %v360 = vld [vmem:[%s9] sm:$0xff]
    %v361 = vld [vmem:[%s9 + $0x8] sm:$0xff]
    %v362 = vld [vmem:[%s9 + $0x10] sm:$0xff]
    %v363 = vld [vmem:[%s9 + $0x18] sm:$0xff]
    %v364 = vld [vmem:[%s10] sm:$0x1]
    %v366 = vlaneseq
    %v367 = vshrl.u32 %v366, 7
    %v368 = vsub.s32 0, %v367
    %v369 = vrot.slane %v364, %v368
    %v372 = vsel %vm47, %v358, 0
    %v375 = vsel %vm47, %v359, 0
    %377 = vmatprep.subr.mxu0 0.0
    %378 = vmatpush1.msra.mxu0 %v360
    %379 = vmatprep.subr.mxu0 0.0
    %380 = vmatpush1.msra.mxu0 %v361
    %381 = vmatprep.subr.mxu0 0.0
    %382 = vmatpush1.msra.mxu0 %v362
    %383 = vmatprep.subr.mxu0 0.0
    %384 = vmatpush1.msra.mxu0 %v363
    %385 = vmatprep.subr.mxu0 0.0
    %386 = vmatpush1.msra.mxu0 0.0
    %387 = vmatprep.subr.mxu0 0.0
    %388 = vmatpush1.msra.mxu0 0.0
    %389 = vmatprep.subr.mxu0 0.0
    %390 = vmatpush1.msra.mxu0 0.0
    %391 = vmatprep.subr.mxu0 0.0
    %392 = vmatpush1.msra.mxu0 0.0
    %393 = vmatprep.subr.mxu0 0.0
    %394 = vmatpush1.msra.mxu0 0.0
    %395 = vmatprep.subr.mxu0 0.0
    %396 = vmatpush1.msra.mxu0 0.0
    %397 = vmatprep.subr.mxu0 0.0
    %398 = vmatpush1.msra.mxu0 0.0
    %399 = vmatprep.subr.mxu0 0.0
    %400 = vmatpush1.msra.mxu0 0.0
    %401 = vmatprep.subr.mxu0 0.0
    %402 = vmatpush1.msra.mxu0 0.0
    %403 = vmatprep.subr.mxu0 0.0
    %404 = vmatpush1.msra.mxu0 0.0
    %405 = vmatprep.subr.mxu0 0.0
    %406 = vmatpush1.msra.mxu0 0.0
    %407 = vmatprep.subr.mxu0 0.0
    %408 = vmatpush1.msra.mxu0 0.0
    %409 = vmatprep.subr.mxu0 0.0
    %410 = vmatpush1.msra.mxu0 0.0
    %411 = vmatprep.subr.mxu0 0.0
    %412 = vmatpush1.msra.mxu0 0.0
    %413 = vmatprep.subr.mxu0 0.0
    %414 = vmatpush1.msra.mxu0 0.0
    %415 = vmatprep.subr.mxu0 0.0
    %416 = vmatpush1.msra.mxu0 0.0
    %417 = vmatprep.subr.mxu0 0.0
    %418 = vmatpush1.msra.mxu0 0.0
    %419 = vmatprep.subr.mxu0 0.0
    %420 = vmatpush1.msra.mxu0 0.0
    %421 = vmatprep.subr.mxu0 0.0
    %422 = vmatpush1.msra.mxu0 0.0
    %423 = vmatprep.subr.mxu0 0.0
    %424 = vmatpush1.msra.mxu0 0.0
    %425 = vmatprep.subr.mxu0 0.0
    %426 = vmatpush1.msra.mxu0 0.0
    %427 = vmatprep.subr.mxu0 0.0
    %428 = vmatpush1.msra.mxu0 0.0
    %429 = vmatprep.subr.mxu0 0.0
    %430 = vmatpush1.msra.mxu0 0.0
    %431 = vmatprep.subr.mxu0 0.0
    %432 = vmatpush1.msra.mxu0 0.0
    %433 = vmatprep.subr.mxu0 0.0
    %434 = vmatpush1.msra.mxu0 0.0
    %435 = vmatprep.subr.mxu0 0.0
    %436 = vmatpush1.msra.mxu0 0.0
    %437 = vmatprep.subr.mxu0 0.0
    %438 = vmatpush1.msra.mxu0 0.0
    %439 = vmatprep.subr.mxu0 0.0
    %440 = vmatpush1.msra.mxu0 0.0
    %441 = vmatprep.mubr.f32.mxu0 0.0
    %442 = vmatmul.mubr.f32.gmra.mrb[0].mxu0 %v372
    %v443 = vpop.f32.mrb[0].mxu0
    %v444 = vadd.f32 %v369, %v443
    %v445 = vpop.f32.mrb[0].mxu0
    %446 = vmatprep.mubr.f32.mxu0 0.0
    %447 = vmatmul.mubr.f32.gmra.mrb[0].mxu0 %v375
    %v448 = vpop.f32.mrb[0].mxu0
    %v449 = vadd.f32 %v369, %v448
    %v450 = vpop.f32.mrb[0].mxu0
    %451 = vdwg.mxu0
    %452 = vst.msk [vmem:[#allocation2] sm:$0xff] %vm47, %v444
    %453 = vst.msk [vmem:[#allocation2 + $0x8] sm:$0xff] %vm47, %v449
    %456 = vrot.lane.b32.xlu0 %v444, 96
    %v457 = vpop.permute.xlu0 %456
    %458 = vrot.lane.b32.xlu0 %v449, 96
    %v459 = vpop.permute.xlu0 %458
    %462 = vst.msk [vmem:[#allocation4] sm:$0xff] %vm47, %v457
    %463 = vst.msk [vmem:[#allocation4 + $0x8] sm:$0xff] %vm47, %v459
    %464 = vrot.lane.b32.xlu0 %v444, 64
    %v465 = vpop.permute.xlu0 %464
    %466 = vrot.lane.b32.xlu0 %v449, 64
    %v467 = vpop.permute.xlu0 %466
    %470 = vst.msk [vmem:[#allocation6] sm:$0xff] %vm47, %v465
    %471 = vst.msk [vmem:[#allocation6 + $0x8] sm:$0xff] %vm47, %v467
    // Predicated region
    $region46: #{tpu_custom_call.1} parent=1 // pred_check
      _
    $region47: #{tpu_custom_call.1} parent=1 // pred_check_branch
      %473 = sbr.rel (0) target = $region49
    $region48: #{tpu_custom_call.1} parent=1 // pred_region
      %s475 = ssub.s32 256, 256
      %476 = vsyncadd [#allocation3], %s475
      %s477 = sshll.u32 [#allocation2], 4
      %s478 = int_to_ptr.vmem [resolvable:$true] %s477
      %483 = dma.vmem_to_hbm [thread:$0]  %s478, 256, %s11, [#allocation3], 128, 128, 8
    $region49: #{tpu_custom_call.1} parent=1 // pred_fallthru
      _
    // Predicated region
    $region50: #{tpu_custom_call.1} parent=1 // pred_check
      _
    $region51: #{tpu_custom_call.1} parent=1 // pred_check_branch
      %485 = sbr.rel (0) target = $region53
    $region52: #{tpu_custom_call.1} parent=1 // pred_region
      %s487 = ssub.s32 256, 256
      %488 = vsyncadd [#allocation5], %s487
      %s489 = sshll.u32 [#allocation4], 4
      %s490 = int_to_ptr.vmem [resolvable:$true] %s489
      %495 = dma.vmem_to_hbm [thread:$0]  %s490, 256, %s12, [#allocation5], 128, 128, 8
    $region53: #{tpu_custom_call.1} parent=1 // pred_fallthru
      _
    // Predicated region
    $region54: #{tpu_custom_call.1} parent=1 // pred_check
      _
    $region55: #{tpu_custom_call.1} parent=1 // pred_check_branch
      %497 = sbr.rel (0) target = $region57
    $region56: #{tpu_custom_call.1} parent=1 // pred_region
      %s499 = ssub.s32 256, 256
      %500 = vsyncadd [#allocation5], %s499
      %s501 = sshll.u32 [#allocation6], 4
      %s502 = int_to_ptr.vmem [resolvable:$true] %s501
      %507 = dma.vmem_to_hbm [thread:$0]  %s502, 256, %s13, [#allocation5], 128, 128, 8
    $region57: #{tpu_custom_call.1} parent=1 // pred_fallthru
      _
    // Predicated region
    $region58: #{tpu_custom_call.1} parent=1 // pred_check
      _
    $region59: #{tpu_custom_call.1} parent=1 // pred_check_branch
      %509 = sbr.rel (0) target = $region61
    $region60: #{tpu_custom_call.1} parent=1 // pred_region
      %510 = dma.done [#allocation3], 256
    $region61: #{tpu_custom_call.1} parent=1 // pred_fallthru
      _
    // Predicated region
    $region62: #{tpu_custom_call.1} parent=1 // pred_check
      _
    $region63: #{tpu_custom_call.1} parent=1 // pred_check_branch
      %512 = sbr.rel (0) target = $region65
    $region64: #{tpu_custom_call.1} parent=1 // pred_region
      %513 = dma.done [#allocation5], 256
    $region65: #{tpu_custom_call.1} parent=1 // pred_fallthru
      _
    // Predicated region
    $region66: #{tpu_custom_call.1} parent=1 // pred_check
      _
    $region67: #{tpu_custom_call.1} parent=1 // pred_check_branch
      %515 = sbr.rel (0) target = $region69
    $region68: #{tpu_custom_call.1} parent=1 // pred_region
      %516 = dma.done [#allocation5], 256
    $region69: #{tpu_custom_call.1} parent=1 // pred_fallthru
      _
    %517 = vsyncpa [#allocation3], 1
    %518 = vsyncpa [#allocation5], 1

</llo_original>
